<compile_context>
chip_gen: v5e
topology: v5e:2x2
jax: 0.10.0
libtpu: 0.0.40
codegen_flags: <defaults>
</compile_context>

<pallas_src>
import jax
import jax.numpy as jnp
import numpy as np
from jax.experimental import pallas as pl
from jax.experimental.pallas import tpu as pltpu


def _round_up(n, m):
    return ((n + m - 1) // m) * m


def critic_kernel(s_ref, a_ref, w1s_ref, w1a_ref, b1_ref, w2_ref, b2_ref,
                  w3_ref, b3_ref, o_ref):
    # fc1 on the concatenated [state, action] == split matmuls (bf16 MXU, f32 acc).
    s = s_ref[...].astype(jnp.bfloat16)
    a = a_ref[...].astype(jnp.bfloat16)
    h1 = (jnp.dot(s, w1s_ref[...], preferred_element_type=jnp.float32)
          + jnp.dot(a, w1a_ref[...], preferred_element_type=jnp.float32)
          + b1_ref[...])
    h1 = jnp.maximum(h1, 0.0)                                         # ReLU

    # fc2 (bf16 MXU, f32 acc).
    h2 = jnp.dot(h1.astype(jnp.bfloat16), w2_ref[...],
                 preferred_element_type=jnp.float32) + b2_ref[...]
    h2 = jnp.maximum(h2, 0.0)                                         # ReLU

    # q head (out_features=1): (1, fc2) @ (fc2, TB) -> (1, TB).  The result is
    # already lane-major, so the output tile is compact (one f32 per batch row,
    # single unmasked lane-dense store + contiguous HBM writeback).
    q_row = jnp.dot(w3_ref[...], h2.T,
                    preferred_element_type=jnp.float32) + b3_ref[0, 0]
    o_ref[...] = q_row.reshape(o_ref.shape).astype(o_ref.dtype)


def critic_network_forward(state, action, params, *, batch_tile=2048):
    """state: (B, input_dims) f32, action: (B, n_actions) f32 -> (B, 1) f32."""
    w1s, w1a, b1, w2, b2, w3, b3 = params
    B, Ds = state.shape
    Da = action.shape[1]
    fc1 = w1s.shape[1]
    fc2 = w2.shape[1]

    # Tolerate (1,), (1,1) or scalar head bias (PyTorch gives a (1,) bias).
    b3 = jnp.asarray(b3, jnp.float32).reshape(1, 1)

    # Batch tile: large (amortizes ~0.35us/grid-step overhead) but capped at
    # ceil(B/2) rounded to a sublane multiple so the grid has >= 2 parallel
    # steps for the two v7x TensorCores.  Small batches round up to 8.
    TB = max(8, min(batch_tile, _round_up(pl.cdiv(B, 2), 8)))
    num_tiles = pl.cdiv(B, TB)   # ragged last tile OK: clipped DMA; extra lanes
                                 # hold garbage that the final [:B] slice drops.

    out = pl.pallas_call(
        critic_kernel,
        out_shape=jax.ShapeDtypeStruct((num_tiles, 1, TB), jnp.float32),
        grid_spec=pltpu.PrefetchScalarGridSpec(
            num_scalar_prefetch=0,
            grid=(num_tiles,),
            in_specs=[
                pl.BlockSpec((TB, Ds), lambda i: (i, 0)),            # state tile
                pl.BlockSpec((TB, Da), lambda i: (i, 0)),            # action tile
                pl.BlockSpec((Ds, fc1), lambda i: (0, 0)),           # W1 (state rows)
                pl.BlockSpec((Da, fc1), lambda i: (0, 0)),           # W1 (action rows)
                pl.BlockSpec((1, fc1), lambda i: (0, 0)),            # b1
                pl.BlockSpec((fc1, fc2), lambda i: (0, 0)),          # W2
                pl.BlockSpec((1, fc2), lambda i: (0, 0)),            # b2
                pl.BlockSpec((1, fc2), lambda i: (0, 0)),            # W_q as a row
                pl.BlockSpec(memory_space=pltpu.MemorySpace.SMEM),   # b_q scalar
            ],
            out_specs=pl.BlockSpec((1, 1, TB), lambda i: (i, 0, 0)),
        ),
        compiler_params=pltpu.CompilerParams(
            dimension_semantics=("parallel",)),
    )(state, action, w1s, w1a, b1, w2, b2, w3, b3)

    # Compact output: flatten (num_tiles, 1, TB) and keep the first B rows.
    return out.reshape(-1)[:B].reshape(B, 1)


def init_params(key, input_dims, n_actions, fc1_dims=256, fc2_dims=256):
    """PyTorch nn.Linear default init (U[-1/sqrt(fan_in), +]); weights as (in, out)."""
    ks = jax.random.split(key, 6)

    def linear(kw, kb, fan_in, fan_out):
        bound = 1.0 / np.sqrt(fan_in)
        w = jax.random.uniform(kw, (fan_in, fan_out), jnp.float32, -bound, bound)
        b = jax.random.uniform(kb, (1, fan_out), jnp.float32, -bound, bound)
        return w, b

    w1, b1 = linear(ks[0], ks[1], input_dims + n_actions, fc1_dims)
    w2, b2 = linear(ks[2], ks[3], fc1_dims, fc2_dims)
    w3, b3 = linear(ks[4], ks[5], fc2_dims, 1)

    # Split W1 into the state / action row blocks: cat([s,a]) @ W1 == s@W1s + a@W1a.
    # bf16 casts done once here (not per call); no feature-dim padding needed.
    w1s = w1[:input_dims].astype(jnp.bfloat16)
    w1a = w1[input_dims:].astype(jnp.bfloat16)
    w2 = w2.astype(jnp.bfloat16)
    w3_row = w3.T                    # (1, fc2), kept f32 for the q head
    b3 = b3.reshape(1, 1)
    return (w1s, w1a, b1, w2, b2, w3_row, b3)


def critic_network_ref(state, action, params):
    """Pure-JAX reference with identical numerics (bf16 weights, f32 accumulation)."""
    w1s, w1a, b1, w2, b2, w3, b3 = params
    h1 = jnp.maximum(
        jnp.dot(state.astype(jnp.bfloat16), w1s, preferred_element_type=jnp.float32)
        + jnp.dot(action.astype(jnp.bfloat16), w1a, preferred_element_type=jnp.float32)
        + b1, 0.0)
    h2 = jnp.maximum(
        jnp.dot(h1.astype(jnp.bfloat16), w2, preferred_element_type=jnp.float32) + b2,
        0.0)
    return jnp.sum(h2 * w3, axis=-1, keepdims=True) + jnp.reshape(b3, ())


if __name__ == "__main__":
    key = jax.random.PRNGKey(0)
    k_param, k_s, k_a = jax.random.split(key, 3)

    batch, input_dims, n_actions = 32, 8, 2
    params = init_params(k_param, input_dims, n_actions)
    state = jax.random.normal(k_s, (batch, input_dims), jnp.float32)
    action = jax.random.normal(k_a, (batch, n_actions), jnp.float32)

    q_ref = jax.block_until_ready(critic_network_ref(state, action, params))

    # Default tiling: B=32 -> TB=16, grid=2 (multi-tile, megacore-shardable path).
    q = jax.block_until_ready(critic_network_forward(state, action, params))
    assert q.shape == (batch, 1)
    np.testing.assert_allclose(np.asarray(q), np.asarray(q_ref), rtol=5e-3, atol=5e-3)

    # Ragged last tile: B=50 -> TB=32, grid=2 with a clipped final DMA; the
    # garbage lanes it produces are discarded by the wrapper's [:B] slice.
    batch2 = 50
    s2 = jax.random.normal(jax.random.PRNGKey(1), (batch2, input_dims), jnp.float32)
    a2 = jax.random.normal(jax.random.PRNGKey(2), (batch2, n_actions), jnp.float32)
    q2 = jax.block_until_ready(critic_network_forward(s2, a2, params))
    q2_ref = critic_network_ref(s2, a2, params)
    assert q2.shape == (batch2, 1)
    np.testing.assert_allclose(np.asarray(q2), np.asarray(q2_ref), rtol=5e-3, atol=5e-3)

    print("KERNEL_OK")
</pallas_src>

<mosaic_0001>
module attributes {stable_mosaic.version = 11 : i64} {
  func.func @critic_kernel(%arg0: i32, %arg1: memref<16x8xf32, #tpu.memory_space<vmem>>, %arg2: memref<16x2xf32, #tpu.memory_space<vmem>>, %arg3: memref<8x256xbf16, #tpu.memory_space<vmem>>, %arg4: memref<2x256xbf16, #tpu.memory_space<vmem>>, %arg5: memref<1x256xf32, #tpu.memory_space<vmem>>, %arg6: memref<256x256xbf16, #tpu.memory_space<vmem>>, %arg7: memref<1x256xf32, #tpu.memory_space<vmem>>, %arg8: memref<1x256xf32, #tpu.memory_space<vmem>>, %arg9: memref<1x1xf32, #tpu.memory_space<smem>>, %arg10: memref<1x1x16xf32, #tpu.memory_space<vmem>>) attributes {dimension_semantics = [#tpu.dimension_semantics<parallel>], iteration_bounds = array<i64: 2>, scalar_prefetch = 0 : i64, scratch_operands = 0 : i64, tpu.core_type = #tpu.core_type<tc>, window_params = [{transform_indices = @transform_0, window_bounds = array<i64: 16, 8>}, {transform_indices = @transform_1, window_bounds = array<i64: 16, 2>}, {pipeline_mode = #tpu.pipeline_mode<synchronous>, transform_indices = @transform_2, window_bounds = array<i64: 8, 256>}, {pipeline_mode = #tpu.pipeline_mode<synchronous>, transform_indices = @transform_3, window_bounds = array<i64: 2, 256>}, {pipeline_mode = #tpu.pipeline_mode<synchronous>, transform_indices = @transform_4, window_bounds = array<i64: 1, 256>}, {pipeline_mode = #tpu.pipeline_mode<synchronous>, transform_indices = @transform_5, window_bounds = array<i64: 256, 256>}, {pipeline_mode = #tpu.pipeline_mode<synchronous>, transform_indices = @transform_6, window_bounds = array<i64: 1, 256>}, {pipeline_mode = #tpu.pipeline_mode<synchronous>, transform_indices = @transform_7, window_bounds = array<i64: 1, 256>}, {transform_indices = @transform_8, window_bounds = array<i64: 1, 1>}, {transform_indices = @transform_9, window_bounds = array<i64: 1, 1, 16>}]} {
    %c0 = arith.constant 0 : index
    %c0_0 = arith.constant 0 : index
    %0 = vector.load %arg1[%c0, %c0_0] : memref<16x8xf32, #tpu.memory_space<vmem>>, vector<16x8xf32>
    %1 = arith.truncf %0 : vector<16x8xf32> to vector<16x8xbf16>
    %c0_1 = arith.constant 0 : index
    %c0_2 = arith.constant 0 : index
    %2 = vector.load %arg2[%c0_1, %c0_2] : memref<16x2xf32, #tpu.memory_space<vmem>>, vector<16x2xf32>
    %3 = arith.truncf %2 : vector<16x2xf32> to vector<16x2xbf16>
    %c0_3 = arith.constant 0 : index
    %c0_4 = arith.constant 0 : index
    %4 = vector.load %arg3[%c0_3, %c0_4] : memref<8x256xbf16, #tpu.memory_space<vmem>>, vector<8x256xbf16>
    %cst = arith.constant dense<0.000000e+00> : vector<16x256xf32>
    %5 = tpu.matmul %1, %4, %cst {dimension_numbers = #tpu.dot_dimension_numbers<[1], [0], [0], [1], [0, 0, 1, 1], [], []>} : vector<16x8xbf16>, vector<8x256xbf16>, vector<16x256xf32> -> vector<16x256xf32>
    %c0_5 = arith.constant 0 : index
    %c0_6 = arith.constant 0 : index
    %6 = vector.load %arg4[%c0_5, %c0_6] : memref<2x256xbf16, #tpu.memory_space<vmem>>, vector<2x256xbf16>
    %cst_7 = arith.constant dense<0.000000e+00> : vector<16x256xf32>
    %7 = tpu.matmul %3, %6, %cst_7 {dimension_numbers = #tpu.dot_dimension_numbers<[1], [0], [0], [1], [0, 0, 1, 1], [], []>} : vector<16x2xbf16>, vector<2x256xbf16>, vector<16x256xf32> -> vector<16x256xf32>
    %8 = arith.addf %5, %7 : vector<16x256xf32>
    %c0_8 = arith.constant 0 : index
    %c0_9 = arith.constant 0 : index
    %9 = vector.load %arg5[%c0_8, %c0_9] : memref<1x256xf32, #tpu.memory_space<vmem>>, vector<1x256xf32>
    %10 = vector.broadcast %9 : vector<1x256xf32> to vector<16x256xf32>
    %11 = arith.addf %8, %10 : vector<16x256xf32>
    %cst_10 = arith.constant 0.000000e+00 : f32
    %12 = vector.broadcast %cst_10 : f32 to vector<16x256xf32>
    %13 = arith.maximumf %11, %12 : vector<16x256xf32>
    %14 = arith.truncf %13 : vector<16x256xf32> to vector<16x256xbf16>
    %c0_11 = arith.constant 0 : index
    %c0_12 = arith.constant 0 : index
    %15 = vector.load %arg6[%c0_11, %c0_12] : memref<256x256xbf16, #tpu.memory_space<vmem>>, vector<256x256xbf16>
    %cst_13 = arith.constant dense<0.000000e+00> : vector<16x256xf32>
    %16 = tpu.matmul %14, %15, %cst_13 {dimension_numbers = #tpu.dot_dimension_numbers<[1], [0], [0], [1], [0, 0, 1, 1], [], []>} : vector<16x256xbf16>, vector<256x256xbf16>, vector<16x256xf32> -> vector<16x256xf32>
    %c0_14 = arith.constant 0 : index
    %c0_15 = arith.constant 0 : index
    %17 = vector.load %arg7[%c0_14, %c0_15] : memref<1x256xf32, #tpu.memory_space<vmem>>, vector<1x256xf32>
    %18 = vector.broadcast %17 : vector<1x256xf32> to vector<16x256xf32>
    %19 = arith.addf %16, %18 : vector<16x256xf32>
    %cst_16 = arith.constant 0.000000e+00 : f32
    %20 = vector.broadcast %cst_16 : f32 to vector<16x256xf32>
    %21 = arith.maximumf %19, %20 : vector<16x256xf32>
    %c0_17 = arith.constant 0 : index
    %c0_18 = arith.constant 0 : index
    %22 = vector.load %arg8[%c0_17, %c0_18] : memref<1x256xf32, #tpu.memory_space<vmem>>, vector<1x256xf32>
    %23 = tpu.transpose %21, [1, 0] : vector<16x256xf32> -> vector<256x16xf32>
    %cst_19 = arith.constant dense<0.000000e+00> : vector<1x16xf32>
    %24 = tpu.matmul %22, %23, %cst_19 {dimension_numbers = #tpu.dot_dimension_numbers<[1], [0], [0], [1], [0, 0, 1, 1], [], []>} : vector<1x256xf32>, vector<256x16xf32>, vector<1x16xf32> -> vector<1x16xf32>
    %c0_20 = arith.constant 0 : index
    %c0_21 = arith.constant 0 : index
    %25 = memref.load %arg9[%c0_20, %c0_21] : memref<1x1xf32, #tpu.memory_space<smem>>
    %26 = vector.broadcast %25 : f32 to vector<1x16xf32>
    %27 = arith.addf %24, %26 : vector<1x16xf32>
    %28 = vector.shape_cast %27 : vector<1x16xf32> to vector<1x1x16xf32>
    %c0_22 = arith.constant 0 : index
    %c0_23 = arith.constant 0 : index
    %c0_24 = arith.constant 0 : index
    %29 = vector.load %arg10[%c0_22, %c0_23, %c0_24] : memref<1x1x16xf32, #tpu.memory_space<vmem>>, vector<1x1x16xf32>
    tpu.vector_store %arg10[%c0_22, %c0_23, %c0_24], %28 {strides = array<i32>} : memref<1x1x16xf32, #tpu.memory_space<vmem>>, vector<1x1x16xf32>,
    return
  }
  func.func @transform_0(%arg0: i32) -> (i32, i32) {
    %c0_i32 = arith.constant 0 : i32
    %c0_i32_0 = arith.constant 0 : i32
    return %arg0, %c0_i32 : i32, i32
  }
  func.func @transform_1(%arg0: i32) -> (i32, i32) {
    %c0_i32 = arith.constant 0 : i32
    %c0_i32_0 = arith.constant 0 : i32
    return %arg0, %c0_i32 : i32, i32
  }
  func.func @transform_2(%arg0: i32) -> (i32, i32) {
    %c0_i32 = arith.constant 0 : i32
    %c0_i32_0 = arith.constant 0 : i32
    %c0_i32_1 = arith.constant 0 : i32
    return %c0_i32, %c0_i32_0 : i32, i32
  }
  func.func @transform_3(%arg0: i32) -> (i32, i32) {
    %c0_i32 = arith.constant 0 : i32
    %c0_i32_0 = arith.constant 0 : i32
    %c0_i32_1 = arith.constant 0 : i32
    return %c0_i32, %c0_i32_0 : i32, i32
  }
  func.func @transform_4(%arg0: i32) -> (i32, i32) {
    %c0_i32 = arith.constant 0 : i32
    %c0_i32_0 = arith.constant 0 : i32
    %c0_i32_1 = arith.constant 0 : i32
    return %c0_i32, %c0_i32_0 : i32, i32
  }
  func.func @transform_5(%arg0: i32) -> (i32, i32) {
    %c0_i32 = arith.constant 0 : i32
    %c0_i32_0 = arith.constant 0 : i32
    %c0_i32_1 = arith.constant 0 : i32
    return %c0_i32, %c0_i32_0 : i32, i32
  }
  func.func @transform_6(%arg0: i32) -> (i32, i32) {
    %c0_i32 = arith.constant 0 : i32
    %c0_i32_0 = arith.constant 0 : i32
    %c0_i32_1 = arith.constant 0 : i32
    return %c0_i32, %c0_i32_0 : i32, i32
  }
  func.func @transform_7(%arg0: i32) -> (i32, i32) {
    %c0_i32 = arith.constant 0 : i32
    %c0_i32_0 = arith.constant 0 : i32
    %c0_i32_1 = arith.constant 0 : i32
    return %c0_i32, %c0_i32_0 : i32, i32
  }
  func.func @transform_8(%arg0: i32) -> (i32, i32) {
    %c0_i32 = arith.constant 0 : i32
    %c0_i32_0 = arith.constant 0 : i32
    %c0_i32_1 = arith.constant 0 : i32
    return %c0_i32, %c0_i32_0 : i32, i32
  }
  func.func @transform_9(%arg0: i32) -> (i32, i32, i32) {
    %c0_i32 = arith.constant 0 : i32
    %c0_i32_0 = arith.constant 0 : i32
    %c0_i32_1 = arith.constant 0 : i32
    return %arg0, %c0_i32, %c0_i32_0 : i32, i32, i32
  }
}

</mosaic_0001>

<llo_original>
// kernel: tpu_custom_call.1
$region0: #{tpu_custom_call.1}
  #allocation0 [shape = 'u32[]', space=smem, size = 0x4, offset = 0x4, fixed_abs, tag = 'smem constant byte address 0x4 - core index']
  #allocation1 [shape = 'u32[72,128]{1,0:T(1,128)}', space=vmem, size = 0x9000, scoped, tag = 'internal scratch']
  #allocation2 [shape = 'f32[1,1]{1,0:T(1,128)S(6)}', space=smem, size = 0x200, scoped, tag = 'scoped memory for tpu_custom_call.1']
  %s0 = inlined_call_operand.vmem [shape: f32[32,8], index: 0, kind: input, shape index: {}]
  %s1 = inlined_call_operand.vmem [shape: f32[32,2], index: 1, kind: input, shape index: {}]
  %s2 = inlined_call_operand.vmem [shape: bf16[8,256], index: 2, kind: input, shape index: {}]
  %s3 = inlined_call_operand.vmem [shape: bf16[2,256], index: 3, kind: input, shape index: {}]
  %s4 = inlined_call_operand.vmem [shape: f32[1,256], index: 4, kind: input, shape index: {}]
  %s5 = inlined_call_operand.hbm [shape: bf16[256,256], index: 5, kind: input, shape index: {}]
  %s6 = inlined_call_operand.vmem [shape: f32[1,256], index: 6, kind: input, shape index: {}]
  %s7 = inlined_call_operand.vmem [shape: f32[1,256], index: 7, kind: input, shape index: {}]
  %s8 = inlined_call_operand.<no memory space> [shape: f32[1,1], index: 8, kind: input, shape index: {}]
  %s9 = inlined_call_operand.hbm [shape: f32[2,1,16], index: 9, kind: output, shape index: {}]
  %s10 = sld [smem:[#allocation0]]
  $region73: #{tpu_custom_call.1} parent=0
    _
  %s12 = ssub.s32 1, %s10
  %s13 = scalar_select 0, %s12, %s10
  %14 = sst [smem:[#allocation2]] %s8
  $region1: #{tpu_custom_call.1} parent=0
    #allocation3 [shape = 'u8[131072]{0}', space=vmem, size = 0x20000, scoped, tag = 'input window, operand 5, single buffered']
    #allocation4 [shape = 's32[2]{0}', space=sflag, size = 0x8, scoped, tag = 'scoped memory for tpu_custom_call.1']
    #allocation5 [shape = 's32[2]{0}', space=sflag, size = 0x8, scoped, tag = 'scoped memory for tpu_custom_call.1']
    #allocation6 [shape = 'u8[1024]{0}', space=vmem, size = 0x400, scoped, tag = 'output window, operand 0']
    %15 = vsyncpa [#allocation4], 0
    %16 = vsyncpa [#allocation5], 0
    %s17 = scalar_lea.sflag [#allocation5], 1
    %18 = vsyncpa %s17, 0
    loop: start=0, step=1, limit=4
    $region2: #{tpu_custom_call.1} parent=1 // loop_pre_header
      _
    $region3: #{tpu_custom_call.1} parent=1 // loop_header
      %s20 = sphi 0, %s24
      %p21 = scmp.ge.s32.totalorder %s20, 4
      %s30 = sphi 0, %s32
      %s33 = sphi 0, %s30
      %s34 = sphi 0, %s33
      %s50 = sphi 0, %s34
      %s56 = sphi 0, %s58
      %s59 = sphi 0, %s56
      %s60 = sphi 0, %s59
      %s76 = sphi 0, %s60
      %s80 = sphi 0, %s80
      %s82 = sphi 0, %s80
      %s83 = sphi 0, %s82
      %s97 = sphi 0, %s83
      %s101 = sphi 0, %s101
      %s103 = sphi 0, %s101
      %s104 = sphi 0, %s103
      %s118 = sphi 0, %s104
      %s122 = sphi 0, %s122
      %s124 = sphi 0, %s122
      %s125 = sphi 0, %s124
      %s139 = sphi 0, %s125
      %s143 = sphi 0, %s143
      %s145 = sphi 0, %s143
      %s146 = sphi 0, %s145
      %s160 = sphi 0, %s146
      %s164 = sphi 0, %s164
      %s166 = sphi 0, %s164
      %s167 = sphi 0, %s166
      %s181 = sphi 0, %s167
      %s185 = sphi 0, %s185
      %s187 = sphi 0, %s185
      %s188 = sphi 0, %s187
      %s202 = sphi 0, %s188
      %s206 = sphi 0, %s206
      %s208 = sphi 0, %s206
      %s209 = sphi 0, %s208
      %s223 = sphi 0, %s209
      %s229 = sphi 0, %s231
      %s232 = sphi 0, %s229
      %s233 = sphi 0, %s232
      %s249 = sphi 0, %s233
    $region4: #{tpu_custom_call.1} parent=1 // loop_header_branch
      %23 = sbr.rel (%p21) target = $region8
    $region5: #{tpu_custom_call.1} parent=1 // loop_body
      %s25 = ssub.s32 %s20, 1
      %s26 = ssub.s32 %s20, 2
      %s27 = sadd.s32 %s20, 1
      %s28 = ssub.s32 %s20, %s27
      %p29 = scmp.eq.s32.totalorder %s28, 0
      %s31 = sadd.s32 %s30, 1
      %s32 = scalar_select %p29, %s30, %s31
      %p35 = pneg %p29
      %p36 = scmp.eq.s32.totalorder %s20, 1
      %p37 = por %p35, %p36
      %p38 = scmp.ne.s32.totalorder %s30, %s33
      %p39 = scmp.eq.s32.totalorder %s20, 0
      %p40 = por %p38, %p39
      %p41 = scmp.ne.s32.totalorder %s30, %s33
      %p42 = scmp.eq.s32.totalorder %s25, 1
      %p43 = por %p41, %p42
      %p44 = scmp.ne.s32.totalorder %s33, %s34
      %p45 = scmp.eq.s32.totalorder %s25, 0
      %p46 = por %p44, %p45
      %p47 = scmp.ne.s32.totalorder %s33, %s34
      %p48 = scmp.eq.s32.totalorder %s26, 1
      %p49 = por %p47, %p48
      %p51 = scmp.ne.s32.totalorder %s34, %s50
      %p52 = scmp.eq.s32.totalorder %s26, 0
      %p53 = por %p51, %p52
      %s54 = ssub.s32 %s20, %s27
      %p55 = scmp.eq.s32.totalorder %s54, 0
      %s57 = sadd.s32 %s56, 1
      %s58 = scalar_select %p55, %s56, %s57
      %p61 = pneg %p55
      %p62 = scmp.eq.s32.totalorder %s20, 1
      %p63 = por %p61, %p62
      %p64 = scmp.ne.s32.totalorder %s56, %s59
      %p65 = scmp.eq.s32.totalorder %s20, 0
      %p66 = por %p64, %p65
      %p67 = scmp.ne.s32.totalorder %s56, %s59
      %p68 = scmp.eq.s32.totalorder %s25, 1
      %p69 = por %p67, %p68
      %p70 = scmp.ne.s32.totalorder %s59, %s60
      %p71 = scmp.eq.s32.totalorder %s25, 0
      %p72 = por %p70, %p71
      %p73 = scmp.ne.s32.totalorder %s59, %s60
      %p74 = scmp.eq.s32.totalorder %s26, 1
      %p75 = por %p73, %p74
      %p77 = scmp.ne.s32.totalorder %s60, %s76
      %p78 = scmp.eq.s32.totalorder %s26, 0
      %p79 = por %p77, %p78
      %s81 = sadd.s32 %s80, 1
      %p84 = scmp.eq.s32.totalorder %s20, 1
      %p85 = scmp.ne.s32.totalorder %s80, %s82
      %p86 = scmp.eq.s32.totalorder %s20, 0
      %p87 = por %p85, %p86
      %p88 = scmp.ne.s32.totalorder %s80, %s82
      %p89 = scmp.eq.s32.totalorder %s25, 1
      %p90 = por %p88, %p89
      %p91 = scmp.ne.s32.totalorder %s82, %s83
      %p92 = scmp.eq.s32.totalorder %s25, 0
      %p93 = por %p91, %p92
      %p94 = scmp.ne.s32.totalorder %s82, %s83
      %p95 = scmp.eq.s32.totalorder %s26, 1
      %p96 = por %p94, %p95
      %p98 = scmp.ne.s32.totalorder %s83, %s97
      %p99 = scmp.eq.s32.totalorder %s26, 0
      %p100 = por %p98, %p99
      %s102 = sadd.s32 %s101, 1
      %p105 = scmp.eq.s32.totalorder %s20, 1
      %p106 = scmp.ne.s32.totalorder %s101, %s103
      %p107 = scmp.eq.s32.totalorder %s20, 0
      %p108 = por %p106, %p107
      %p109 = scmp.ne.s32.totalorder %s101, %s103
      %p110 = scmp.eq.s32.totalorder %s25, 1
      %p111 = por %p109, %p110
      %p112 = scmp.ne.s32.totalorder %s103, %s104
      %p113 = scmp.eq.s32.totalorder %s25, 0
      %p114 = por %p112, %p113
      %p115 = scmp.ne.s32.totalorder %s103, %s104
      %p116 = scmp.eq.s32.totalorder %s26, 1
      %p117 = por %p115, %p116
      %p119 = scmp.ne.s32.totalorder %s104, %s118
      %p120 = scmp.eq.s32.totalorder %s26, 0
      %p121 = por %p119, %p120
      %s123 = sadd.s32 %s122, 1
      %p126 = scmp.eq.s32.totalorder %s20, 1
      %p127 = scmp.ne.s32.totalorder %s122, %s124
      %p128 = scmp.eq.s32.totalorder %s20, 0
      %p129 = por %p127, %p128
      %p130 = scmp.ne.s32.totalorder %s122, %s124
      %p131 = scmp.eq.s32.totalorder %s25, 1
      %p132 = por %p130, %p131
      %p133 = scmp.ne.s32.totalorder %s124, %s125
      %p134 = scmp.eq.s32.totalorder %s25, 0
      %p135 = por %p133, %p134
      %p136 = scmp.ne.s32.totalorder %s124, %s125
      %p137 = scmp.eq.s32.totalorder %s26, 1
      %p138 = por %p136, %p137
      %p140 = scmp.ne.s32.totalorder %s125, %s139
      %p141 = scmp.eq.s32.totalorder %s26, 0
      %p142 = por %p140, %p141
      %s144 = sadd.s32 %s143, 1
      %p147 = scmp.eq.s32.totalorder %s20, 1
      %p148 = scmp.ne.s32.totalorder %s143, %s145
      %p149 = scmp.eq.s32.totalorder %s20, 0
      %p150 = por %p148, %p149
      %p151 = scmp.ne.s32.totalorder %s143, %s145
      %p152 = scmp.eq.s32.totalorder %s25, 1
      %p153 = por %p151, %p152
      %p154 = scmp.ne.s32.totalorder %s145, %s146
      %p155 = scmp.eq.s32.totalorder %s25, 0
      %p156 = por %p154, %p155
      %p157 = scmp.ne.s32.totalorder %s145, %s146
      %p158 = scmp.eq.s32.totalorder %s26, 1
      %p159 = por %p157, %p158
      %p161 = scmp.ne.s32.totalorder %s146, %s160
      %p162 = scmp.eq.s32.totalorder %s26, 0
      %p163 = por %p161, %p162
      %s165 = sadd.s32 %s164, 1
      %p168 = scmp.eq.s32.totalorder %s20, 1
      %p169 = scmp.ne.s32.totalorder %s164, %s166
      %p170 = scmp.eq.s32.totalorder %s20, 0
      %p171 = por %p169, %p170
      %p172 = scmp.ne.s32.totalorder %s164, %s166
      %p173 = scmp.eq.s32.totalorder %s25, 1
      %p174 = por %p172, %p173
      %p175 = scmp.ne.s32.totalorder %s166, %s167
      %p176 = scmp.eq.s32.totalorder %s25, 0
      %p177 = por %p175, %p176
      %p178 = scmp.ne.s32.totalorder %s166, %s167
      %p179 = scmp.eq.s32.totalorder %s26, 1
      %p180 = por %p178, %p179
      %p182 = scmp.ne.s32.totalorder %s167, %s181
      %p183 = scmp.eq.s32.totalorder %s26, 0
      %p184 = por %p182, %p183
      %s186 = sadd.s32 %s185, 1
      %p189 = scmp.eq.s32.totalorder %s20, 1
      %p190 = scmp.ne.s32.totalorder %s185, %s187
      %p191 = scmp.eq.s32.totalorder %s20, 0
      %p192 = por %p190, %p191
      %p193 = scmp.ne.s32.totalorder %s185, %s187
      %p194 = scmp.eq.s32.totalorder %s25, 1
      %p195 = por %p193, %p194
      %p196 = scmp.ne.s32.totalorder %s187, %s188
      %p197 = scmp.eq.s32.totalorder %s25, 0
      %p198 = por %p196, %p197
      %p199 = scmp.ne.s32.totalorder %s187, %s188
      %p200 = scmp.eq.s32.totalorder %s26, 1
      %p201 = por %p199, %p200
      %p203 = scmp.ne.s32.totalorder %s188, %s202
      %p204 = scmp.eq.s32.totalorder %s26, 0
      %p205 = por %p203, %p204
      %s207 = sadd.s32 %s206, 1
      %p210 = scmp.eq.s32.totalorder %s20, 1
      %p211 = scmp.ne.s32.totalorder %s206, %s208
      %p212 = scmp.eq.s32.totalorder %s20, 0
      %p213 = por %p211, %p212
      %p214 = scmp.ne.s32.totalorder %s206, %s208
      %p215 = scmp.eq.s32.totalorder %s25, 1
      %p216 = por %p214, %p215
      %p217 = scmp.ne.s32.totalorder %s208, %s209
      %p218 = scmp.eq.s32.totalorder %s25, 0
      %p219 = por %p217, %p218
      %p220 = scmp.ne.s32.totalorder %s208, %s209
      %p221 = scmp.eq.s32.totalorder %s26, 1
      %p222 = por %p220, %p221
      %p224 = scmp.ne.s32.totalorder %s209, %s223
      %p225 = scmp.eq.s32.totalorder %s26, 0
      %p226 = por %p224, %p225
      %s227 = ssub.s32 %s20, %s27
      %p228 = scmp.eq.s32.totalorder %s227, 0
      %s230 = sadd.s32 %s229, 1
      %s231 = scalar_select %p228, %s229, %s230
      %p234 = pneg %p228
      %p235 = scmp.eq.s32.totalorder %s20, 1
      %p236 = por %p234, %p235
      %p237 = scmp.ne.s32.totalorder %s229, %s232
      %p238 = scmp.eq.s32.totalorder %s20, 0
      %p239 = por %p237, %p238
      %p240 = scmp.ne.s32.totalorder %s229, %s232
      %p241 = scmp.eq.s32.totalorder %s25, 1
      %p242 = por %p240, %p241
      %p243 = scmp.ne.s32.totalorder %s232, %s233
      %p244 = scmp.eq.s32.totalorder %s25, 0
      %p245 = por %p243, %p244
      %p246 = scmp.ne.s32.totalorder %s232, %s233
      %p247 = scmp.eq.s32.totalorder %s26, 1
      %p248 = por %p246, %p247
      %p250 = scmp.ne.s32.totalorder %s233, %s249
      %p251 = scmp.eq.s32.totalorder %s26, 0
      %p252 = por %p250, %p251
      %p253 = scmp.le.s32.totalorder 1, %s20
      %p254 = scmp.lt.s32.totalorder %s20, 3
      %p255 = pnand %p253, %p254
      %p256 = pneg %p255
      // Predicated region
      $region9: #{tpu_custom_call.1} parent=5 // pred_check
        _
      $region10: #{tpu_custom_call.1} parent=5 // pred_check_branch
        %258 = sbr.rel (%p255) target = $region12
      $region11: #{tpu_custom_call.1} parent=5 // pred_region
        %s259 = ssub.s32 %s20, 1
        // Predicated region
        $region13: #{tpu_custom_call.1} parent=11 // pred_check
          %p260 = pneg %p93
        $region14: #{tpu_custom_call.1} parent=11 // pred_check_branch
          %262 = sbr.rel (%p260) target = $region16
        $region15: #{tpu_custom_call.1} parent=11 // pred_region
          _
        $region16: #{tpu_custom_call.1} parent=11 // pred_fallthru
          _
        // Predicated region
        $region17: #{tpu_custom_call.1} parent=11 // pred_check
          %p263 = pneg %p114
        $region18: #{tpu_custom_call.1} parent=11 // pred_check_branch
          %265 = sbr.rel (%p263) target = $region20
        $region19: #{tpu_custom_call.1} parent=11 // pred_region
          _
        $region20: #{tpu_custom_call.1} parent=11 // pred_fallthru
          _
        // Predicated region
        $region21: #{tpu_custom_call.1} parent=11 // pred_check
          %p266 = pneg %p135
        $region22: #{tpu_custom_call.1} parent=11 // pred_check_branch
          %268 = sbr.rel (%p266) target = $region24
        $region23: #{tpu_custom_call.1} parent=11 // pred_region
          _
        $region24: #{tpu_custom_call.1} parent=11 // pred_fallthru
          _
        // Predicated region
        $region25: #{tpu_custom_call.1} parent=11 // pred_check
          %p269 = pneg %p156
        $region26: #{tpu_custom_call.1} parent=11 // pred_check_branch
          %271 = sbr.rel (%p269) target = $region28
        $region27: #{tpu_custom_call.1} parent=11 // pred_region
          %273 = vsyncadd [#allocation4], 0
          %s274 = sshll.u32 %s5, 4
          %s275 = int_to_ptr.hbm [resolvable:$true] %s274
          %s276 = sshll.u32 [#allocation3], 4
          %s277 = int_to_ptr.vmem [resolvable:$true] %s276
          %282 = dma.hbm_to_vmem [thread:$0]  %s275, 4096, %s277, [#allocation4], 128, 128, 8
        $region28: #{tpu_custom_call.1} parent=11 // pred_fallthru
          _
        // Predicated region
        $region29: #{tpu_custom_call.1} parent=11 // pred_check
          %p283 = pneg %p177
        $region30: #{tpu_custom_call.1} parent=11 // pred_check_branch
          %285 = sbr.rel (%p283) target = $region32
        $region31: #{tpu_custom_call.1} parent=11 // pred_region
          _
        $region32: #{tpu_custom_call.1} parent=11 // pred_fallthru
          _
        // Predicated region
        $region33: #{tpu_custom_call.1} parent=11 // pred_check
          %p286 = pneg %p198
        $region34: #{tpu_custom_call.1} parent=11 // pred_check_branch
          %288 = sbr.rel (%p286) target = $region36
        $region35: #{tpu_custom_call.1} parent=11 // pred_region
          _
        $region36: #{tpu_custom_call.1} parent=11 // pred_fallthru
          _
        // Predicated region
        $region37: #{tpu_custom_call.1} parent=11 // pred_check
          %p289 = pneg %p219
        $region38: #{tpu_custom_call.1} parent=11 // pred_check_branch
          %291 = sbr.rel (%p289) target = $region40
        $region39: #{tpu_custom_call.1} parent=11 // pred_region
          _
        $region40: #{tpu_custom_call.1} parent=11 // pred_fallthru
          _
      $region12: #{tpu_custom_call.1} parent=5 // pred_fallthru
        _
      %p292 = scmp.lt.s32.totalorder %s20, 2
      // Predicated region
      $region41: #{tpu_custom_call.1} parent=5 // pred_check
        %p293 = pneg %p292
      $region42: #{tpu_custom_call.1} parent=5 // pred_check_branch
        %295 = sbr.rel (%p293) target = $region44
      $region43: #{tpu_custom_call.1} parent=5 // pred_region
        // Predicated region
        $region45: #{tpu_custom_call.1} parent=43 // pred_check
          %p296 = pneg %p40
        $region46: #{tpu_custom_call.1} parent=43 // pred_check_branch
          %298 = sbr.rel (%p296) target = $region48
        $region47: #{tpu_custom_call.1} parent=43 // pred_region
          %s299 = smul.u32 2, %s20
          %p300 = scmp.lt.s32.totalorder %s299, 3
          %s301 = scalar_select %p300, %s299, 3
          %s302 = smul.addr %s301, 8
          %s303 = scalar_lea.vmem %s0, %s302
          %s304 = smul.u32 2, %s20
        $region48: #{tpu_custom_call.1} parent=43 // pred_fallthru
          _
        // Predicated region
        $region49: #{tpu_custom_call.1} parent=43 // pred_check
          %p305 = pneg %p66
        $region50: #{tpu_custom_call.1} parent=43 // pred_check_branch
          %307 = sbr.rel (%p305) target = $region52
        $region51: #{tpu_custom_call.1} parent=43 // pred_region
          %s308 = smul.u32 2, %s20
          %p309 = scmp.lt.s32.totalorder %s308, 3
          %s310 = scalar_select %p309, %s308, 3
          %s311 = smul.addr %s310, 8
          %s312 = scalar_lea.vmem %s1, %s311
          %s313 = smul.u32 2, %s20
        $region52: #{tpu_custom_call.1} parent=43 // pred_fallthru
          _
      $region44: #{tpu_custom_call.1} parent=5 // pred_fallthru
        _
      %p314 = scmp.le.s32.totalorder 1, %s20
      %p315 = scmp.lt.s32.totalorder %s20, 3
      %p316 = pnand %p314, %p315
      %p317 = pneg %p316
      // Predicated region
      $region53: #{tpu_custom_call.1} parent=5 // pred_check
        _
      $region54: #{tpu_custom_call.1} parent=5 // pred_check_branch
        %319 = sbr.rel (%p316) target = $region56
      $region55: #{tpu_custom_call.1} parent=5 // pred_region
        %s320 = ssub.s32 %s20, 1
        // Predicated region
        $region57: #{tpu_custom_call.1} parent=55 // pred_check
          %p321 = pneg %p156
        $region58: #{tpu_custom_call.1} parent=55 // pred_check_branch
          %323 = sbr.rel (%p321) target = $region60
        $region59: #{tpu_custom_call.1} parent=55 // pred_region
          %325 = dma.done [#allocation4], 4096
        $region60: #{tpu_custom_call.1} parent=55 // pred_fallthru
          _
        %s326 = smul.u32 2, %s25
        %p327 = scmp.lt.s32.totalorder %s326, 3
        %s328 = scalar_select %p327, %s326, 3
        %s329 = smul.addr %s328, 8
        %s330 = scalar_lea.vmem %s0, %s329
        %p331 = pneg %p46
        %p332 = pneg %p43
        %s333 = smul.u32 2, %s25
        %p334 = scmp.lt.s32.totalorder %s333, 3
        %s335 = scalar_select %p334, %s333, 3
        %s336 = smul.addr %s335, 8
        %s337 = scalar_lea.vmem %s1, %s336
        %p338 = pneg %p72
        %p339 = pneg %p69
        %p340 = pneg %p93
        %p341 = pneg %p90
        %p342 = pneg %p114
        %p343 = pneg %p111
        %p344 = pneg %p135
        %p345 = pneg %p132
        %p346 = pneg %p156
        %p347 = pneg %p153
        %p348 = pneg %p177
        %p349 = pneg %p174
        %p350 = pneg %p198
        %p351 = pneg %p195
        %p352 = pneg %p219
        %p353 = pneg %p216
        %p354 = pneg %p245
        %p355 = pneg %p242
        %s356 = sand.u32 %s232, 1
        %s357 = scalar_lea.sflag [#allocation5], %s356
        %s358 = sand.u32 %s232, 1
        %s359 = scalar_lea.vmem [#allocation6], %s358
        %s360 = smul.u32 2, %s25
        %p361 = scmp.lt.s32.totalorder %s360, 3
        %s362 = scalar_select %p361, %s360, 3
        %s363 = smul.addr %s362, 8
        %s364 = scalar_lea.vmem %s0, %s363
        %s365 = smul.u32 2, %s25
        %s366 = smul.u32 2, %s25
        %p367 = scmp.lt.s32.totalorder %s366, 3
        %s368 = scalar_select %p367, %s366, 3
        %s369 = smul.addr %s368, 8
        %s370 = scalar_lea.vmem %s1, %s369
        %s371 = smul.u32 2, %s25
        %v373 = vld [vmem:[%s364] sm:$0xff]
        %v374 = vld [vmem:[%s364 + $0x8] sm:$0xff]
        %v375 = vpack.c.bf16 %v374, %v373
        %v376 = vld [vmem:[%s370] sm:$0xff]
        %v377 = vld [vmem:[%s370 + $0x8] sm:$0xff]
        %v378 = vpack.c.bf16 %v377, %v376
        %v379 = vld [vmem:[%s2] sm:$0xff]
        %v380 = vld [vmem:[%s3] sm:$0x3]
        %382 = vst [vmem:[#allocation1] ss:$9 sm:$0xff] %v380
        %v383 = vld [vmem:[#allocation1] sm:$0xff]
        %v384 = vld [vmem:[#allocation1 + $0x9] sm:$0xff]
        %vm385 = vcmask 15360
        %v387 = vsel %vm385, %v378, 0
        %vm389 = vcmask 1040384
        %v390 = vsel %vm389, %v383, 0
        %v392 = vsel %vm389, %v384, 0
        %394 = vmatpush.bf16.msra.mxu0 0
        %395 = vmatpush.bf16.msra.mxu0 0
        %396 = vmatpush.bf16.msra.mxu0 0
        %397 = vmatpush.bf16.msra.mxu0 0
        %398 = vmatpush.bf16.msra.mxu0 0
        %399 = vmatpush.bf16.msra.mxu0 0
        %400 = vmatpush.bf16.msra.mxu0 0
        %401 = vmatpush.bf16.msra.mxu0 %v390
        %402 = vmatmul.bf16.gmra.mxu0 %v387
        %v403 = vpop.f32.mrf.mxu0
        %v404 = vadd.f32 0.0, %v403
        %v405 = vpop.f32.mrf.mxu0
        %v406 = vadd.f32 0.0, %v405
        %407 = vdwg.mxu0
        %408 = vmatpush.bf16.msra.mxu0 0
        %409 = vmatpush.bf16.msra.mxu0 0
        %410 = vmatpush.bf16.msra.mxu0 0
        %411 = vmatpush.bf16.msra.mxu0 0
        %412 = vmatpush.bf16.msra.mxu0 0
        %413 = vmatpush.bf16.msra.mxu0 0
        %414 = vmatpush.bf16.msra.mxu0 0
        %415 = vmatpush.bf16.msra.mxu0 %v392
        %416 = vmatmul.bf16.gmra.mxu0 %v387
        %v417 = vpop.f32.mrf.mxu0
        %v418 = vadd.f32 0.0, %v417
        %v419 = vpop.f32.mrf.mxu0
        %v420 = vadd.f32 0.0, %v419
        %421 = vdwg.mxu0
        %v423 = vunpack.c.l.b16 %v379
        %v424 = vunpack.c.h.b16 %v379
        %v425 = vpack.c.b16 %v423, %v423
        %v426 = vpack.c.b16 %v424, %v424
        %vm427 = vcmask 64512
        %v429 = vsel %vm427, %v375, 0
        %vm431 = vcmask 1043456
        %v433 = vsel %vm431, %v425, 0
        %v436 = vsel %vm431, %v426, 0
        %438 = vmatpush.bf16.msra.mxu0 0
        %439 = vmatpush.bf16.msra.mxu0 0
        %440 = vmatpush.bf16.msra.mxu0 0
        %441 = vmatpush.bf16.msra.mxu0 0
        %442 = vmatpush.bf16.msra.mxu0 0
        %443 = vmatpush.bf16.msra.mxu0 0
        %444 = vmatpush.bf16.msra.mxu0 0
        %445 = vmatpush.bf16.msra.mxu0 %v433
        %446 = vmatmul.bf16.gmra.mxu0 %v429
        %v447 = vpop.f32.mrf.mxu0
        %v448 = vadd.f32 %v404, %v447
        %v449 = vpop.f32.mrf.mxu0
        %v450 = vadd.f32 %v406, %v449
        %451 = vdwg.mxu0
        %452 = vmatpush.bf16.msra.mxu0 0
        %453 = vmatpush.bf16.msra.mxu0 0
        %454 = vmatpush.bf16.msra.mxu0 0
        %455 = vmatpush.bf16.msra.mxu0 0
        %456 = vmatpush.bf16.msra.mxu0 0
        %457 = vmatpush.bf16.msra.mxu0 0
        %458 = vmatpush.bf16.msra.mxu0 0
        %459 = vmatpush.bf16.msra.mxu0 %v436
        %460 = vmatmul.bf16.gmra.mxu0 %v429
        %v461 = vpop.f32.mrf.mxu0
        %v462 = vadd.f32 %v418, %v461
        %v463 = vpop.f32.mrf.mxu0
        %v464 = vadd.f32 %v420, %v463
        %465 = vdwg.mxu0
        %v466 = vld [vmem:[%s4] sm:$0x3]
        %v468 = vperm.slane %v466, 0
        %v469 = vperm.slane %v466, 1
        %v472 = vadd.f32 %v448, %v468
        %v473 = vadd.f32 %v462, %v469
        %v474 = vadd.f32 %v450, %v468
        %v475 = vadd.f32 %v464, %v469
        %v476 = vmax.f32 %v472, 0.0
        %v477 = vmax.f32 %v473, 0.0
        %v478 = vmax.f32 %v474, 0.0
        %v479 = vmax.f32 %v475, 0.0
        %v480 = vpack.c.bf16 %v478, %v476
        %v481 = vpack.c.bf16 %v479, %v477
        %v482 = vld [vmem:[#allocation3] sm:$0xff]
        %v483 = vld [vmem:[#allocation3 + $0x8] sm:$0xff]
        %v484 = vld [vmem:[#allocation3 + $0x10] sm:$0xff]
        %v485 = vld [vmem:[#allocation3 + $0x18] sm:$0xff]
        %v486 = vld [vmem:[#allocation3 + $0x20] sm:$0xff]
        %v487 = vld [vmem:[#allocation3 + $0x28] sm:$0xff]
        %v488 = vld [vmem:[#allocation3 + $0x30] sm:$0xff]
        %v489 = vld [vmem:[#allocation3 + $0x38] sm:$0xff]
        %v490 = vld [vmem:[#allocation3 + $0x40] sm:$0xff]
        %v491 = vld [vmem:[#allocation3 + $0x48] sm:$0xff]
        %v492 = vld [vmem:[#allocation3 + $0x50] sm:$0xff]
        %v493 = vld [vmem:[#allocation3 + $0x58] sm:$0xff]
        %v494 = vld [vmem:[#allocation3 + $0x60] sm:$0xff]
        %v495 = vld [vmem:[#allocation3 + $0x68] sm:$0xff]
        %v496 = vld [vmem:[#allocation3 + $0x70] sm:$0xff]
        %v497 = vld [vmem:[#allocation3 + $0x78] sm:$0xff]
        %v498 = vld [vmem:[#allocation3 + $0x80] sm:$0xff]
        %v499 = vld [vmem:[#allocation3 + $0x88] sm:$0xff]
        %v500 = vld [vmem:[#allocation3 + $0x90] sm:$0xff]
        %v501 = vld [vmem:[#allocation3 + $0x98] sm:$0xff]
        %v502 = vld [vmem:[#allocation3 + $0xa0] sm:$0xff]
        %v503 = vld [vmem:[#allocation3 + $0xa8] sm:$0xff]
        %v504 = vld [vmem:[#allocation3 + $0xb0] sm:$0xff]
        %v505 = vld [vmem:[#allocation3 + $0xb8] sm:$0xff]
        %v506 = vld [vmem:[#allocation3 + $0xc0] sm:$0xff]
        %v507 = vld [vmem:[#allocation3 + $0xc8] sm:$0xff]
        %v508 = vld [vmem:[#allocation3 + $0xd0] sm:$0xff]
        %v509 = vld [vmem:[#allocation3 + $0xd8] sm:$0xff]
        %v510 = vld [vmem:[#allocation3 + $0xe0] sm:$0xff]
        %v511 = vld [vmem:[#allocation3 + $0xe8] sm:$0xff]
        %v512 = vld [vmem:[#allocation3 + $0xf0] sm:$0xff]
        %v513 = vld [vmem:[#allocation3 + $0xf8] sm:$0xff]
        %v514 = vld [vmem:[%s6] sm:$0x3]
        %v516 = vperm.slane %v514, 0
        %v517 = vperm.slane %v514, 1
        %v552 = vunpack.c.l.b16 %v482
        %v553 = vunpack.c.h.b16 %v482
        %v554 = vunpack.c.l.b16 %v483
        %v555 = vunpack.c.h.b16 %v483
        %v556 = vunpack.c.l.b16 %v484
        %v557 = vunpack.c.h.b16 %v484
        %v558 = vunpack.c.l.b16 %v485
        %v559 = vunpack.c.h.b16 %v485
        %v560 = vunpack.c.l.b16 %v486
        %v561 = vunpack.c.h.b16 %v486
        %v562 = vunpack.c.l.b16 %v487
        %v563 = vunpack.c.h.b16 %v487
        %v564 = vunpack.c.l.b16 %v488
        %v565 = vunpack.c.h.b16 %v488
        %v566 = vunpack.c.l.b16 %v489
        %v567 = vunpack.c.h.b16 %v489
        %v568 = vunpack.c.l.b16 %v490
        %v569 = vunpack.c.h.b16 %v490
        %v570 = vunpack.c.l.b16 %v491
        %v571 = vunpack.c.h.b16 %v491
        %v572 = vunpack.c.l.b16 %v492
        %v573 = vunpack.c.h.b16 %v492
        %v574 = vunpack.c.l.b16 %v493
        %v575 = vunpack.c.h.b16 %v493
        %v576 = vunpack.c.l.b16 %v494
        %v577 = vunpack.c.h.b16 %v494
        %v578 = vunpack.c.l.b16 %v495
        %v579 = vunpack.c.h.b16 %v495
        %v580 = vunpack.c.l.b16 %v496
        %v581 = vunpack.c.h.b16 %v496
        %v582 = vunpack.c.l.b16 %v497
        %v583 = vunpack.c.h.b16 %v497
        %v584 = vunpack.c.l.b16 %v498
        %v585 = vunpack.c.h.b16 %v498
        %v586 = vunpack.c.l.b16 %v499
        %v587 = vunpack.c.h.b16 %v499
        %v588 = vunpack.c.l.b16 %v500
        %v589 = vunpack.c.h.b16 %v500
        %v590 = vunpack.c.l.b16 %v501
        %v591 = vunpack.c.h.b16 %v501
        %v592 = vunpack.c.l.b16 %v502
        %v593 = vunpack.c.h.b16 %v502
        %v594 = vunpack.c.l.b16 %v503
        %v595 = vunpack.c.h.b16 %v503
        %v596 = vunpack.c.l.b16 %v504
        %v597 = vunpack.c.h.b16 %v504
        %v598 = vunpack.c.l.b16 %v505
        %v599 = vunpack.c.h.b16 %v505
        %v600 = vunpack.c.l.b16 %v506
        %v601 = vunpack.c.h.b16 %v506
        %v602 = vunpack.c.l.b16 %v507
        %v603 = vunpack.c.h.b16 %v507
        %v604 = vunpack.c.l.b16 %v508
        %v605 = vunpack.c.h.b16 %v508
        %v606 = vunpack.c.l.b16 %v509
        %v607 = vunpack.c.h.b16 %v509
        %v608 = vunpack.c.l.b16 %v510
        %v609 = vunpack.c.h.b16 %v510
        %v610 = vunpack.c.l.b16 %v511
        %v611 = vunpack.c.h.b16 %v511
        %v612 = vunpack.c.l.b16 %v512
        %v613 = vunpack.c.h.b16 %v512
        %v614 = vunpack.c.l.b16 %v513
        %v615 = vunpack.c.h.b16 %v513
        %v616 = vpack.c.b16 %v554, %v552
        %v617 = vpack.c.b16 %v555, %v553
        %v618 = vpack.c.b16 %v558, %v556
        %v619 = vpack.c.b16 %v559, %v557
        %v620 = vpack.c.b16 %v562, %v560
        %v621 = vpack.c.b16 %v563, %v561
        %v622 = vpack.c.b16 %v566, %v564
        %v623 = vpack.c.b16 %v567, %v565
        %v624 = vpack.c.b16 %v570, %v568
        %v625 = vpack.c.b16 %v571, %v569
        %v626 = vpack.c.b16 %v574, %v572
        %v627 = vpack.c.b16 %v575, %v573
        %v628 = vpack.c.b16 %v578, %v576
        %v629 = vpack.c.b16 %v579, %v577
        %v630 = vpack.c.b16 %v582, %v580
        %v631 = vpack.c.b16 %v583, %v581
        %v632 = vpack.c.b16 %v586, %v584
        %v633 = vpack.c.b16 %v587, %v585
        %v634 = vpack.c.b16 %v590, %v588
        %v635 = vpack.c.b16 %v591, %v589
        %v636 = vpack.c.b16 %v594, %v592
        %v637 = vpack.c.b16 %v595, %v593
        %v638 = vpack.c.b16 %v598, %v596
        %v639 = vpack.c.b16 %v599, %v597
        %v640 = vpack.c.b16 %v602, %v600
        %v641 = vpack.c.b16 %v603, %v601
        %v642 = vpack.c.b16 %v606, %v604
        %v643 = vpack.c.b16 %v607, %v605
        %v644 = vpack.c.b16 %v610, %v608
        %v645 = vpack.c.b16 %v611, %v609
        %v646 = vpack.c.b16 %v614, %v612
        %v647 = vpack.c.b16 %v615, %v613
        %680 = vmatpush.bf16.msra.mxu0 %v630
        %681 = vmatpush.bf16.msra.mxu0 %v628
        %682 = vmatpush.bf16.msra.mxu0 %v626
        %683 = vmatpush.bf16.msra.mxu0 %v624
        %684 = vmatpush.bf16.msra.mxu0 %v622
        %685 = vmatpush.bf16.msra.mxu0 %v620
        %686 = vmatpush.bf16.msra.mxu0 %v618
        %687 = vmatpush.bf16.msra.mxu0 %v616
        %688 = vmatmul.bf16.gmra.mxu0 %v480
        %v689 = vpop.f32.mrf.mxu0
        %v690 = vadd.f32 %v516, %v689
        %v691 = vpop.f32.mrf.mxu0
        %v692 = vadd.f32 %v516, %v691
        %693 = vdwg.mxu0
        %694 = vmatpush.bf16.msra.mxu0 %v646
        %695 = vmatpush.bf16.msra.mxu0 %v644
        %696 = vmatpush.bf16.msra.mxu0 %v642
        %697 = vmatpush.bf16.msra.mxu0 %v640
        %698 = vmatpush.bf16.msra.mxu0 %v638
        %699 = vmatpush.bf16.msra.mxu0 %v636
        %700 = vmatpush.bf16.msra.mxu0 %v634
        %701 = vmatpush.bf16.msra.mxu0 %v632
        %702 = vmatmul.bf16.gmra.mxu0 %v481
        %v703 = vpop.f32.mrf.mxu0
        %v704 = vadd.f32 %v690, %v703
        %v705 = vpop.f32.mrf.mxu0
        %v706 = vadd.f32 %v692, %v705
        %707 = vdwg.mxu0
        %708 = vmatpush.bf16.msra.mxu0 %v631
        %709 = vmatpush.bf16.msra.mxu0 %v629
        %710 = vmatpush.bf16.msra.mxu0 %v627
        %711 = vmatpush.bf16.msra.mxu0 %v625
        %712 = vmatpush.bf16.msra.mxu0 %v623
        %713 = vmatpush.bf16.msra.mxu0 %v621
        %714 = vmatpush.bf16.msra.mxu0 %v619
        %715 = vmatpush.bf16.msra.mxu0 %v617
        %716 = vmatmul.bf16.gmra.mxu0 %v480
        %v717 = vpop.f32.mrf.mxu0
        %v718 = vadd.f32 %v517, %v717
        %v719 = vpop.f32.mrf.mxu0
        %v720 = vadd.f32 %v517, %v719
        %721 = vdwg.mxu0
        %722 = vmatpush.bf16.msra.mxu0 %v647
        %723 = vmatpush.bf16.msra.mxu0 %v645
        %724 = vmatpush.bf16.msra.mxu0 %v643
        %725 = vmatpush.bf16.msra.mxu0 %v641
        %726 = vmatpush.bf16.msra.mxu0 %v639
        %727 = vmatpush.bf16.msra.mxu0 %v637
        %728 = vmatpush.bf16.msra.mxu0 %v635
        %729 = vmatpush.bf16.msra.mxu0 %v633
        %730 = vmatmul.bf16.gmra.mxu0 %v481
        %v731 = vpop.f32.mrf.mxu0
        %v732 = vadd.f32 %v718, %v731
        %v733 = vpop.f32.mrf.mxu0
        %v734 = vadd.f32 %v720, %v733
        %735 = vdwg.mxu0
        %v736 = vmax.f32 %v704, 0.0
        %v737 = vmax.f32 %v732, 0.0
        %v738 = vmax.f32 %v706, 0.0
        %v739 = vmax.f32 %v734, 0.0
        %v740 = vld [vmem:[%s7] sm:$0x3]
        %s741 = sld [smem:[#allocation2]]
        %v742 = vstv %s741
        %v744 = vperm.slane %v740, 0
        %v745 = vperm.slane %v740, 1
        %748 = vmatpush.xpose.msra.mxu0 0.0
        %749 = vmatpush.xpose.msra.mxu0 0.0
        %750 = vmatpush.xpose.msra.mxu0 0.0
        %751 = vmatpush.xpose.msra.mxu0 0.0
        %752 = vmatpush.xpose.msra.mxu0 0.0
        %753 = vmatpush.xpose.msra.mxu0 0.0
        %754 = vmatpush.xpose.msra.mxu0 0.0
        %755 = vmatpush.xpose.msra.mxu0 0.0
        %756 = vmatpush.xpose.msra.mxu0 0.0
        %757 = vmatpush.xpose.msra.mxu0 0.0
        %758 = vmatpush.xpose.msra.mxu0 0.0
        %759 = vmatpush.xpose.msra.mxu0 0.0
        %760 = vmatpush.xpose.msra.mxu0 0.0
        %761 = vmatpush.xpose.msra.mxu0 0.0
        %762 = vmatpush.xpose.msra.mxu0 %v738
        %763 = vmatpush.xpose.msra.mxu0 %v736
        %764 = vmatmul.f32.gmra.mxu0 %v744
        %v765 = vpop.f32.mrf.mxu0
        %v766 = vadd.f32 %v742, %v765
        %767 = vdwg.mxu0
        %768 = vmatpush.xpose.msra.mxu0 0.0
        %769 = vmatpush.xpose.msra.mxu0 0.0
        %770 = vmatpush.xpose.msra.mxu0 0.0
        %771 = vmatpush.xpose.msra.mxu0 0.0
        %772 = vmatpush.xpose.msra.mxu0 0.0
        %773 = vmatpush.xpose.msra.mxu0 0.0
        %774 = vmatpush.xpose.msra.mxu0 0.0
        %775 = vmatpush.xpose.msra.mxu0 0.0
        %776 = vmatpush.xpose.msra.mxu0 0.0
        %777 = vmatpush.xpose.msra.mxu0 0.0
        %778 = vmatpush.xpose.msra.mxu0 0.0
        %779 = vmatpush.xpose.msra.mxu0 0.0
        %780 = vmatpush.xpose.msra.mxu0 0.0
        %781 = vmatpush.xpose.msra.mxu0 0.0
        %782 = vmatpush.xpose.msra.mxu0 %v739
        %783 = vmatpush.xpose.msra.mxu0 %v737
        %784 = vmatmul.f32.gmra.mxu0 %v745
        %v785 = vpop.f32.mrf.mxu0
        %v786 = vadd.f32 %v766, %v785
        %787 = vdwg.mxu0
        %vm788 = vcmask 122880
        %789 = vst.msk [vmem:[%s359] sm:$0x1] %vm788, %v786
        %s790 = sand.u32 %s232, 1
        %s791 = scalar_lea.sflag [#allocation5], %s790
        %s792 = sand.u32 %s232, 1
        %s793 = scalar_lea.vmem [#allocation6], %s792
        // Predicated region
        $region61: #{tpu_custom_call.1} parent=55 // pred_check
          %p794 = pneg %p242
        $region62: #{tpu_custom_call.1} parent=55 // pred_check_branch
          %796 = sbr.rel (%p794) target = $region64
        $region63: #{tpu_custom_call.1} parent=55 // pred_region
          %798 = vsyncadd %s791, 0
          %s799 = scalar_lea.hbm %s9, %s25
          %s801 = sshll.u32 %s793, 4
          %s802 = int_to_ptr.vmem [resolvable:$true] %s801
          %s803 = sshll.u32 %s799, 4
          %s804 = int_to_ptr.hbm [resolvable:$true] %s803
          %806 = dma.vmem_to_hbm [thread:$0]  %s802, 16, %s804, %s791
        $region64: #{tpu_custom_call.1} parent=55 // pred_fallthru
          _
      $region56: #{tpu_custom_call.1} parent=5 // pred_fallthru
        _
      %p807 = scmp.le.s32.totalorder 2, %s20
      // Predicated region
      $region65: #{tpu_custom_call.1} parent=5 // pred_check
        %p808 = pneg %p807
      $region66: #{tpu_custom_call.1} parent=5 // pred_check_branch
        %810 = sbr.rel (%p808) target = $region68
      $region67: #{tpu_custom_call.1} parent=5 // pred_region
        %s811 = ssub.s32 %s20, 2
        // Predicated region
        $region69: #{tpu_custom_call.1} parent=67 // pred_check
          %p812 = pneg %p248
        $region70: #{tpu_custom_call.1} parent=67 // pred_check_branch
          %814 = sbr.rel (%p812) target = $region72
        $region71: #{tpu_custom_call.1} parent=67 // pred_region
          %s815 = sand.u32 %s233, 1
          %s816 = scalar_lea.sflag [#allocation5], %s815
          %s817 = sand.u32 %s233, 1
          %s818 = scalar_lea.vmem [#allocation6], %s817
          %820 = dma.done %s816, 16
        $region72: #{tpu_custom_call.1} parent=67 // pred_fallthru
          _
      $region68: #{tpu_custom_call.1} parent=5 // pred_fallthru
        _
    $region6: #{tpu_custom_call.1} parent=1 // loop_footer
      %s24 = sadd.s32 1, %s20
    $region7: #{tpu_custom_call.1} parent=1 // loop_footer_branch
      %19 = sbr.rel target = $region3
    $region8: #{tpu_custom_call.1} parent=1 // loop_exit
      _
    %821 = vsyncpa [#allocation4], 1
    %s822 = scalar_lea.sflag [#allocation4], 1
    %823 = vsyncpa %s822, 1
    %824 = vsyncpa [#allocation5], 1
    %s825 = scalar_lea.sflag [#allocation5], 1
    %826 = vsyncpa %s825, 1

</llo_original>
